<compile_context>
chip_gen: v7x
topology: tpu7x:2x2x1
jax: 0.10.0
libtpu: 0.0.40
codegen_flags: <defaults>
</compile_context>

<pallas_src>
import functools

import jax
import jax.numpy as jnp
from jax.experimental import pallas as pl
from jax.experimental.pallas import tpu as pltpu


_LANE_CANDIDATES = (4096, 2048, 1024, 512, 256, 128)
_MIN_BYTES_FOR_MULTISTEP = 1 << 20   # below this, a single block is cheapest
_RAGGED_LANE_TILE = 32 * 1024        # ragged-path lane tile (multiple of 128)


def _cdiv(a, b):
    return (a + b - 1) // b


def _round_up(x, m):
    return _cdiv(x, m) * m


def _act_quant_kernel(x_ref, o_ref, *, scale):
    # Literal DoReFa forward: round(clamp(x*0.1, 0, 1) * scale) / scale.
    x = x_ref[...].astype(jnp.float32)
    y = jnp.round(jnp.clip(x * 0.1, 0.0, 1.0) * scale)
    o_ref[...] = (y / scale).astype(o_ref.dtype)


def _tpu_block_config():
    """(target block bytes per operand, vmem_limit_bytes) tuned per generation."""
    kind = ""
    try:
        kind = jax.devices()[0].device_kind.lower()
    except Exception:  # defensive: never fail the wrapper on a query
        pass
    # v6e / v7x / v5p: >=64 MiB physical VMEM -> 4 MiB blocks (x2 operands x2
    # pipeline buffers = 16 MiB) with an explicit 48 MiB scoped-VMEM limit.
    if any(tag in kind for tag in ("v6", "v7", "7x", "v5p")):
        return 4 * 1024 * 1024, 48 * 1024 * 1024
    # v5e (16 MiB scoped default) and unknown chips: 2 MiB blocks -> 8 MiB total.
    return 2 * 1024 * 1024, None


def _choose_lane(n):
    """Widest lane width (multiple of 128) dividing n, preferring rows % 8 == 0."""
    for lane in _LANE_CANDIDATES:
        if n % lane == 0 and (n // lane) % 8 == 0:
            return lane
    for lane in _LANE_CANDIDATES:
        if n % lane == 0:
            return lane
    return None


def _choose_tile_rows(rows, lane, itemsize, target_block_bytes):
    """Row-tile height: multiple of 8 (or == rows), under the byte budget, and
    split into >= ~4 (preferably even) grid steps once the array is big enough
    for pipelining / v7x 2-TC sharding to matter."""
    if rows < 8:
        return rows  # full-extent tiny block
    tr = max(8, (target_block_bytes // (lane * itemsize)) // 8 * 8)
    total_bytes = rows * lane * itemsize
    if rows >= 32 and total_bytes >= _MIN_BYTES_FOR_MULTISTEP:
        # >= ~4 steps: DMA/compute overlap + both v7x TensorCores get work.
        tr = min(tr, _round_up(_cdiv(rows, 4), 8))
    tr = min(tr, rows)
    grid = _cdiv(rows, tr)
    if grid > 1 and grid % 2 == 1:
        # Best effort: even step count so a 2-TC split stays balanced on v7x.
        tr_even = max(8, _round_up(_cdiv(rows, grid + 1), 8))
        if tr_even <= rows and _cdiv(rows, tr_even) % 2 == 0:
            tr = tr_even
    return tr


def _run_quant_2d(x2d, scale, target_block_bytes, vmem_limit):
    """Fast path: lane-dense (rows, lane) slab, contiguous row-tiled DMAs."""
    rows, lane = x2d.shape
    itemsize = x2d.dtype.itemsize
    n = rows * lane
    tr = _choose_tile_rows(rows, lane, itemsize, target_block_bytes)

    kernel = functools.partial(_act_quant_kernel, scale=scale)
    return pl.pallas_call(
        kernel,
        out_shape=jax.ShapeDtypeStruct((rows, lane), x2d.dtype),
        grid_spec=pltpu.PrefetchScalarGridSpec(
            num_scalar_prefetch=0,
            grid=(pl.cdiv(rows, tr),),
            in_specs=[pl.BlockSpec((tr, lane), lambda i: (i, 0))],
            out_specs=pl.BlockSpec((tr, lane), lambda i: (i, 0)),
        ),
        compiler_params=pltpu.CompilerParams(
            # Independent row tiles: shards across v7x's two TensorCores.
            dimension_semantics=("parallel",),
            vmem_limit_bytes=vmem_limit,
        ),
        cost_estimate=pl.CostEstimate(
            flops=6 * n, transcendentals=0, bytes_accessed=2 * n * itemsize
        ),
    )(x2d)


def _run_quant_ragged(x, n, scale, vmem_limit):
    """Ragged path (n not a multiple of 128): one pallas_call over a free
    (8, n/8) or (1, n) view; trailing partial lane block is masked in-kernel,
    so there is no extra pad/slice HBM pass."""
    rows = 8 if n % 8 == 0 else 1
    cols = n // rows
    x2d = x.reshape(rows, cols)
    itemsize = x2d.dtype.itemsize
    tile = cols if cols <= _RAGGED_LANE_TILE else _RAGGED_LANE_TILE

    kernel = functools.partial(_act_quant_kernel, scale=scale)
    out2d = pl.pallas_call(
        kernel,
        out_shape=jax.ShapeDtypeStruct((rows, cols), x2d.dtype),
        grid_spec=pltpu.PrefetchScalarGridSpec(
            num_scalar_prefetch=0,
            grid=(pl.cdiv(cols, tile),),
            in_specs=[pl.BlockSpec((rows, tile), lambda i: (0, i))],
            out_specs=pl.BlockSpec((rows, tile), lambda i: (0, i)),
        ),
        compiler_params=pltpu.CompilerParams(
            dimension_semantics=("parallel",),
            vmem_limit_bytes=vmem_limit,
        ),
        cost_estimate=pl.CostEstimate(
            flops=6 * n, transcendentals=0, bytes_accessed=2 * n * itemsize
        ),
    )(x2d)
    return out2d


def activation_quantize(x, a_bits):
    """Forward pass of activation_quantize. x: float array (e.g. NCHW)."""
    assert a_bits != 1, "Binary quantization is not supported"
    if a_bits == 32:
        return x

    scale = float(2 ** a_bits - 1)
    orig_shape = x.shape
    n = x.size
    if n == 0:
        return x

    target_block_bytes, vmem_limit = _tpu_block_config()

    lane = _choose_lane(n)
    if lane is not None:
        # Free (no-copy) reshape to a wide, lane-dense 2D slab.
        x2d = x.reshape(n // lane, lane)
        out2d = _run_quant_2d(x2d, scale, target_block_bytes, vmem_limit)
        return out2d.reshape(orig_shape)

    out2d = _run_quant_ragged(x, n, scale, vmem_limit)
    return out2d.reshape(orig_shape)


def _reference(x, a_bits):
    # Literal torch formulation (same op sequence as the kernel).
    if a_bits == 32:
        return x
    scale = float(2 ** a_bits - 1)
    return jnp.round(jnp.clip(x * 0.1, 0.0, 1.0) * scale) / scale


if __name__ == "__main__":
    key = jax.random.PRNGKey(0)
    k1, k2, k3 = jax.random.split(key, 3)

    # 1) Primary NCHW activation test; scaled so clamp hits both edges.
    x1 = jax.random.normal(k1, (2, 4, 16, 16), dtype=jnp.float32) * 8.0
    out1 = jax.block_until_ready(activation_quantize(x1, 4))
    assert out1.shape == x1.shape and out1.dtype == x1.dtype
    assert jnp.allclose(out1, _reference(x1, 4), atol=1e-6)

    # 2) ~1 MiB input: exercises the multi-step (pipelined, 4-block) grid path.
    x2 = jax.random.normal(k2, (2, 8, 128, 128), dtype=jnp.float32) * 8.0
    out2 = jax.block_until_ready(activation_quantize(x2, 8))
    assert out2.shape == x2.shape
    assert jnp.allclose(out2, _reference(x2, 8), atol=1e-6)

    # 3) Ragged element count (105, not a multiple of 128): masked single-pass path.
    x3 = jax.random.normal(k3, (3, 5, 7), dtype=jnp.float32) * 8.0
    out3 = jax.block_until_ready(activation_quantize(x3, 3))
    assert out3.shape == x3.shape
    assert jnp.allclose(out3, _reference(x3, 3), atol=1e-6)

    # 4) a_bits == 32 identity path.
    out32 = jax.block_until_ready(activation_quantize(x1, 32))
    assert jnp.array_equal(out32, x1)

    print("KERNEL_OK")
</pallas_src>

<mosaic_0001>
module attributes {stable_mosaic.version = 11 : i64} {
  func.func @_act_quant_kernel(%arg0: i32, %arg1: memref<8x256xf32, #tpu.memory_space<vmem>>, %arg2: memref<8x256xf32, #tpu.memory_space<vmem>>) attributes {dimension_semantics = [#tpu.dimension_semantics<parallel>], iteration_bounds = array<i64: 1>, scalar_prefetch = 0 : i64, scratch_operands = 0 : i64, tpu.core_type = #tpu.core_type<tc>, window_params = [{transform_indices = @transform_0, window_bounds = array<i64: 8, 256>}, {transform_indices = @transform_1, window_bounds = array<i64: 8, 256>}]} {
    %c0 = arith.constant 0 : index
    %c0_0 = arith.constant 0 : index
    %0 = vector.load %arg1[%c0, %c0_0] : memref<8x256xf32, #tpu.memory_space<vmem>>, vector<8x256xf32>
    %cst = arith.constant 1.000000e-01 : f32
    %1 = vector.broadcast %cst : f32 to vector<8x256xf32>
    %2 = arith.mulf %0, %1 : vector<8x256xf32>
    %cst_1 = arith.constant 0.000000e+00 : f32
    %cst_2 = arith.constant 1.000000e+00 : f32
    %3 = vector.broadcast %cst_1 : f32 to vector<8x256xf32>
    %4 = arith.maximumf %3, %2 : vector<8x256xf32>
    %5 = vector.broadcast %cst_2 : f32 to vector<8x256xf32>
    %6 = arith.minimumf %5, %4 : vector<8x256xf32>
    %cst_3 = arith.constant 1.500000e+01 : f32
    %7 = vector.broadcast %cst_3 : f32 to vector<8x256xf32>
    %8 = arith.mulf %6, %7 : vector<8x256xf32>
    %9 = math.roundeven %8 : vector<8x256xf32>
    %cst_4 = arith.constant 1.500000e+01 : f32
    %10 = vector.broadcast %cst_4 : f32 to vector<8x256xf32>
    %11 = arith.divf %9, %10 : vector<8x256xf32>
    %c0_5 = arith.constant 0 : index
    %c0_6 = arith.constant 0 : index
    %12 = vector.load %arg2[%c0_5, %c0_6] : memref<8x256xf32, #tpu.memory_space<vmem>>, vector<8x256xf32>
    tpu.vector_store %arg2[%c0_5, %c0_6], %11 {strides = array<i32>} : memref<8x256xf32, #tpu.memory_space<vmem>>, vector<8x256xf32>,
    return
  }
  func.func @transform_0(%arg0: i32) -> (i32, i32) {
    %c0_i32 = arith.constant 0 : i32
    %c0_i32_0 = arith.constant 0 : i32
    return %arg0, %c0_i32 : i32, i32
  }
  func.func @transform_1(%arg0: i32) -> (i32, i32) {
    %c0_i32 = arith.constant 0 : i32
    %c0_i32_0 = arith.constant 0 : i32
    return %arg0, %c0_i32 : i32, i32
  }
}

</mosaic_0001>

<llo_original>
// kernel: tpu_custom_call.1
$region0: #{tpu_custom_call.1}
  #allocation0 [shape = 'u32[]', space=smem, size = 0x4, offset = 0x4, fixed_abs, tag = 'smem constant byte address 0x4 - core index']
  #allocation1 [shape = 'u32[144,128]{1,0:T(1,128)}', space=vmem, size = 0x12000, scoped, tag = 'internal scratch']
  %s0 = inlined_call_operand.hbm [shape: f32[8,256], index: 0, kind: input, shape index: {}]
  %s1 = inlined_call_operand.hbm [shape: f32[8,256], index: 1, kind: output, shape index: {}]
  %s2 = sld [smem:[#allocation0]]
  $region18: #{tpu_custom_call.1} parent=0
    _
  %s4 = ssub.s32 1, %s2
  %s5 = scalar_select 0, %s4, %s2
  $region1: #{tpu_custom_call.1} parent=0
    #allocation2 [shape = 'u8[8192]{0}', space=vmem, size = 0x2000, scoped, tag = 'input window, operand 0, single buffered']
    #allocation3 [shape = 's32[1]{0}', space=sflag, size = 0x4, scoped, tag = 'scoped memory for tpu_custom_call.1']
    #allocation4 [shape = 's32[1]{0}', space=sflag, size = 0x4, scoped, tag = 'scoped memory for tpu_custom_call.1']
    #allocation5 [shape = 'u8[8192]{0}', space=vmem, size = 0x2000, scoped, tag = 'output window, operand 0, single buffered']
    %6 = vsyncpa [#allocation3], 0
    %7 = vsyncpa [#allocation4], 0
    // Predicated region
    $region2: #{tpu_custom_call.1} parent=1 // pred_check
      _
    $region3: #{tpu_custom_call.1} parent=1 // pred_check_branch
      %9 = sbr.rel (0) target = $region5
    $region4: #{tpu_custom_call.1} parent=1 // pred_region
      %s11 = ssub.s32 256, 256
      %12 = vsyncadd [#allocation3], %s11
      %s14 = sshll.u32 [#allocation2], 4
      %s15 = int_to_ptr.vmem [resolvable:$true] %s14
      %17 = dma.hbm_to_vmem [thread:$0]  %s0, 256, %s15, [#allocation3]
    $region5: #{tpu_custom_call.1} parent=1 // pred_fallthru
      _
    // Predicated region
    $region6: #{tpu_custom_call.1} parent=1 // pred_check
      _
    $region7: #{tpu_custom_call.1} parent=1 // pred_check_branch
      %19 = sbr.rel (0) target = $region9
    $region8: #{tpu_custom_call.1} parent=1 // pred_region
      %20 = dma.done [#allocation3], 256
    $region9: #{tpu_custom_call.1} parent=1 // pred_fallthru
      _
    %v21 = vld [vmem:[#allocation2] sm:$0xff]
    %v22 = vld [vmem:[#allocation2 + $0x8] sm:$0xff]
    %v23 = vmul.f32 %v21, 0.1
    %v24 = vmul.f32 %v22, 0.1
    %v25 = vmax.f32 %v23, 0.0
    %v26 = vmax.f32 %v24, 0.0
    %v27 = vmin.f32 %v25, 1.0
    %v28 = vmin.f32 %v26, 1.0
    %v29 = vmul.f32 %v27, 15.0
    %v30 = vmul.f32 %v28, 15.0
    %v31 = vround.ne.pseudo %v29
    %v32 = vround.ne.pseudo %v30
    %v33 = vrcp.pop 15.0
    %v34 = vmul.f32 %v31, %v33
    %v35 = vmul.f32 %v32, %v33
    %36 = vst [vmem:[#allocation5] sm:$0xff] %v34
    %37 = vst [vmem:[#allocation5 + $0x8] sm:$0xff] %v35
    // Predicated region
    $region10: #{tpu_custom_call.1} parent=1 // pred_check
      _
    $region11: #{tpu_custom_call.1} parent=1 // pred_check_branch
      %39 = sbr.rel (0) target = $region13
    $region12: #{tpu_custom_call.1} parent=1 // pred_region
      %s41 = ssub.s32 256, 256
      %42 = vsyncadd [#allocation4], %s41
      %s44 = sshll.u32 [#allocation5], 4
      %s45 = int_to_ptr.vmem [resolvable:$true] %s44
      %47 = dma.vmem_to_hbm [thread:$0]  %s45, 256, %s1, [#allocation4]
    $region13: #{tpu_custom_call.1} parent=1 // pred_fallthru
      _
    // Predicated region
    $region14: #{tpu_custom_call.1} parent=1 // pred_check
      _
    $region15: #{tpu_custom_call.1} parent=1 // pred_check_branch
      %49 = sbr.rel (0) target = $region17
    $region16: #{tpu_custom_call.1} parent=1 // pred_region
      %50 = dma.done [#allocation4], 256
    $region17: #{tpu_custom_call.1} parent=1 // pred_fallthru
      _
    %51 = vsyncpa [#allocation3], 1
    %52 = vsyncpa [#allocation4], 1

</llo_original>
